<compile_context>
chip_gen: v6e
topology: v6e:2x2x1
jax: 0.10.0
libtpu: 0.0.40
codegen_flags: <defaults>
</compile_context>

<pallas_src>
import math

import jax
import jax.numpy as jnp
from jax.experimental import pallas as pl
from jax.experimental.pallas import tpu as pltpu


# --------------------------------------------------------------------------- #
# Kernel
# --------------------------------------------------------------------------- #
def _hyper_linear_kernel(z_ref, wt_ref, b_ref, o_ref):
    # z_ref: (B, Z), wt_ref: (Z, TP), b_ref: (1, TP), o_ref: (B, TP)
    # F.linear(z, W, b) = z @ W.T + b  ==  z @ W_T + b with W_T = W.T ([Z, P]).
    z = z_ref[...].astype(wt_ref.dtype)          # no-op for f32 weights
    acc = jnp.dot(z, wt_ref[...], preferred_element_type=jnp.float32)
    o_ref[...] = (acc + b_ref[...]).astype(o_ref.dtype)


# --------------------------------------------------------------------------- #
# Tiling helpers
# --------------------------------------------------------------------------- #
def _vmem_capacity_bytes():
    try:
        return int(pltpu.get_tpu_info().vmem_capacity_bytes)
    except Exception:
        return 64 * 1024 * 1024  # conservative per-TC value (v7x)


def _choose_tile_p(P, Z, B, w_itemsize, vmem_budget_bytes):
    """Largest divisor of P (preferably a multiple of 128 lanes) whose
    double-buffered weight/bias/output tiles fit the VMEM budget, while
    keeping >= 2 grid steps when P allows (v7x megacore sharding)."""
    # Per-step double-buffered footprint per output column:
    #   weight: 2 * Z * w_itemsize ; bias: 2 * 4 ; out: 2 * B * 4
    per_col_bytes = 2 * (Z * w_itemsize + 4 + B * 4)
    max_tile = max(128, vmem_budget_bytes // per_col_bytes)
    max_tile = (max_tile // 128) * 128

    if P <= 128:
        return P

    cap = min(max_tile, P)
    if P >= 256:
        cap = min(cap, P // 2)  # keep at least 2 grid steps for the 2nd TC

    divs = set()
    for d in range(1, int(math.isqrt(P)) + 1):
        if P % d == 0:
            divs.add(d)
            divs.add(P // d)
    lane_divs = [d for d in divs if d <= cap and d % 128 == 0]
    if lane_divs:
        return max(lane_divs)
    any_divs = [d for d in divs if d <= cap]
    return max(any_divs) if any_divs else P


# --------------------------------------------------------------------------- #
# Wrapper
# --------------------------------------------------------------------------- #
def hyper_linear_weight_forward(z, weight, bias, output_shape,
                                weight_dtype=None, tile_p=None):
    """Pallas implementation of HyperLinearWeight.forward.

    z:      [B, Z] f32
    weight: [P, Z] f32  (stored exactly like the PyTorch nn.Parameter)
    bias:   [P]    f32
    Returns [B, *output_shape] f32.
    """
    B, Z = z.shape
    P = weight.shape[0]
    assert weight.shape == (P, Z), "weight must be [num_param, z_size]"
    assert bias.shape == (P,), "bias must be [num_param]"
    assert P == int(math.prod(output_shape))

    # Optionally stream weights in bf16 (accumulation stays f32); halves HBM
    # traffic for this weight-bandwidth-bound kernel.
    if weight_dtype is not None:
        weight = weight.astype(weight_dtype)
    w_itemsize = jnp.dtype(weight.dtype).itemsize

    # Lane-dense [Z, P] layout for the MXU. In a real deployment store the
    # parameter transposed; the transpose here is a one-time XLA op per call.
    w_t = weight.T

    vmem_cap = _vmem_capacity_bytes()
    if tile_p is None:
        # ~45% of physical VMEM for the streamed tiles; leaves headroom for the
        # resident z block, double-buffered outputs and compiler scratch.
        tile_p = _choose_tile_p(P, Z, B, w_itemsize, int(vmem_cap * 0.45))
    assert P % tile_p == 0, "tile_p must divide num_param"
    grid = (pl.cdiv(P, tile_p),)

    # Scoped-VMEM limit sized to the chosen tiles (defaults are far below
    # physical: 16 MiB on v5e, 32 MiB on v6e/v7x).
    per_step_bytes = 2 * tile_p * (Z * w_itemsize + 4 + B * 4)
    needed = per_step_bytes + B * Z * 4 + (1 << 20)
    vmem_limit = int(min(vmem_cap, max(2 * needed, 32 * 1024 * 1024)))

    out = pl.pallas_call(
        _hyper_linear_kernel,
        out_shape=jax.ShapeDtypeStruct((B, P), jnp.float32),
        grid_spec=pl.GridSpec(
            grid=grid,
            in_specs=[
                pl.BlockSpec((B, Z), lambda j: (0, 0)),        # z resident
                pl.BlockSpec((Z, tile_p), lambda j: (0, j)),   # weight.T tile (lane-dense)
                pl.BlockSpec((1, tile_p), lambda j: (0, j)),   # bias tile
            ],
            out_specs=pl.BlockSpec((B, tile_p), lambda j: (0, j)),
        ),
        compiler_params=pltpu.CompilerParams(
            dimension_semantics=("parallel",),
            vmem_limit_bytes=vmem_limit,
        ),
    )(z, w_t, bias.reshape(1, P))

    return out.reshape((B,) + tuple(output_shape))


# --------------------------------------------------------------------------- #
# Parameter init mirroring HyperLinearWeight.reset_parameters
# --------------------------------------------------------------------------- #
def init_params(key, z_size, output_shape, target_init="tf"):
    num_param = int(math.prod(output_shape))
    f_in = output_shape[1]
    kw, _ = jax.random.split(key)
    if target_init == "tf":
        bound = 1.0 / math.sqrt(f_in)
        # trunc_normal_(std=bound, a=-2*bound, b=2*bound)
        weight = bound * jax.random.truncated_normal(
            kw, lower=-2.0, upper=2.0, shape=(num_param, z_size),
            dtype=jnp.float32,
        )
    elif target_init == "torch":
        gain = math.sqrt(2.0 / (1.0 + 5.0))  # leaky_relu gain, neg_slope=sqrt(5)
        std = gain / math.sqrt(f_in)
        bound = math.sqrt(3.0) * std
        weight = jax.random.uniform(
            kw, (num_param, z_size), minval=-bound, maxval=bound,
            dtype=jnp.float32,
        )
    else:
        raise ValueError(target_init)
    bias = jnp.zeros((num_param,), dtype=jnp.float32)
    return weight, bias


# --------------------------------------------------------------------------- #
# Self-test
# --------------------------------------------------------------------------- #
if __name__ == "__main__":
    key = jax.random.PRNGKey(0)

    # --- Test 1: module-scale shapes (single grid step: P = 128 lanes). -----
    k1z, k1p, k2z, k2p = jax.random.split(key, 4)
    batch, z_size = 2, 32
    output_shape = (8, 16)                       # num_param = 128
    weight, bias = init_params(k1p, z_size, output_shape, target_init="tf")
    z = jax.random.normal(k1z, (batch, z_size), dtype=jnp.float32)

    param = hyper_linear_weight_forward(z, weight, bias, output_shape)
    param = jax.block_until_ready(param)
    ref = (z @ weight.T + bias).reshape((batch,) + output_shape)
    assert param.shape == (batch,) + output_shape
    assert jnp.allclose(param, ref, atol=1e-4, rtol=1e-5)

    # --- Test 2: larger P exercising multi-step grid + VMEM-derived tiles. --
    batch2, z_size2 = 8, 32
    output_shape2 = (256, 64)                    # num_param = 16384
    weight2, bias2 = init_params(k2p, z_size2, output_shape2, target_init="torch")
    z2 = jax.random.normal(k2z, (batch2, z_size2), dtype=jnp.float32)

    param2 = hyper_linear_weight_forward(z2, weight2, bias2, output_shape2)
    param2 = jax.block_until_ready(param2)
    ref2 = (z2 @ weight2.T + bias2).reshape((batch2,) + output_shape2)
    assert param2.shape == (batch2,) + output_shape2
    assert jnp.allclose(param2, ref2, atol=1e-4, rtol=1e-5)

    print("KERNEL_OK")
</pallas_src>

<mosaic_0001>
module attributes {stable_mosaic.version = 11 : i64} {
  func.func @_hyper_linear_kernel(%arg0: i32, %arg1: memref<2x32xf32, #tpu.memory_space<vmem>>, %arg2: memref<32x128xf32, #tpu.memory_space<vmem>>, %arg3: memref<1x128xf32, #tpu.memory_space<vmem>>, %arg4: memref<2x128xf32, #tpu.memory_space<vmem>>) attributes {dimension_semantics = [#tpu.dimension_semantics<parallel>], iteration_bounds = array<i64: 1>, scalar_prefetch = 0 : i64, scratch_operands = 0 : i64, tpu.core_type = #tpu.core_type<tc>, window_params = [{pipeline_mode = #tpu.pipeline_mode<synchronous>, transform_indices = @transform_0, window_bounds = array<i64: 2, 32>}, {transform_indices = @transform_1, window_bounds = array<i64: 32, 128>}, {transform_indices = @transform_2, window_bounds = array<i64: 1, 128>}, {transform_indices = @transform_3, window_bounds = array<i64: 2, 128>}]} {
    %c0 = arith.constant 0 : index
    %c0_0 = arith.constant 0 : index
    %0 = vector.load %arg1[%c0, %c0_0] : memref<2x32xf32, #tpu.memory_space<vmem>>, vector<2x32xf32>
    %c0_1 = arith.constant 0 : index
    %c0_2 = arith.constant 0 : index
    %1 = vector.load %arg2[%c0_1, %c0_2] : memref<32x128xf32, #tpu.memory_space<vmem>>, vector<32x128xf32>
    %cst = arith.constant dense<0.000000e+00> : vector<2x128xf32>
    %2 = tpu.matmul %0, %1, %cst {dimension_numbers = #tpu.dot_dimension_numbers<[1], [0], [0], [1], [0, 0, 1, 1], [], []>} : vector<2x32xf32>, vector<32x128xf32>, vector<2x128xf32> -> vector<2x128xf32>
    %c0_3 = arith.constant 0 : index
    %c0_4 = arith.constant 0 : index
    %3 = vector.load %arg3[%c0_3, %c0_4] : memref<1x128xf32, #tpu.memory_space<vmem>>, vector<1x128xf32>
    %4 = vector.broadcast %3 : vector<1x128xf32> to vector<2x128xf32>
    %5 = arith.addf %2, %4 : vector<2x128xf32>
    %c0_5 = arith.constant 0 : index
    %c0_6 = arith.constant 0 : index
    %6 = vector.load %arg4[%c0_5, %c0_6] : memref<2x128xf32, #tpu.memory_space<vmem>>, vector<2x128xf32>
    tpu.vector_store %arg4[%c0_5, %c0_6], %5 {strides = array<i32>} : memref<2x128xf32, #tpu.memory_space<vmem>>, vector<2x128xf32>,
    return
  }
  func.func @transform_0(%arg0: i32) -> (i32, i32) {
    %c0_i32 = arith.constant 0 : i32
    %c0_i32_0 = arith.constant 0 : i32
    %c0_i32_1 = arith.constant 0 : i32
    return %c0_i32, %c0_i32_0 : i32, i32
  }
  func.func @transform_1(%arg0: i32) -> (i32, i32) {
    %c0_i32 = arith.constant 0 : i32
    %c0_i32_0 = arith.constant 0 : i32
    return %c0_i32, %arg0 : i32, i32
  }
  func.func @transform_2(%arg0: i32) -> (i32, i32) {
    %c0_i32 = arith.constant 0 : i32
    %c0_i32_0 = arith.constant 0 : i32
    return %c0_i32, %arg0 : i32, i32
  }
  func.func @transform_3(%arg0: i32) -> (i32, i32) {
    %c0_i32 = arith.constant 0 : i32
    %c0_i32_0 = arith.constant 0 : i32
    return %c0_i32, %arg0 : i32, i32
  }
}

</mosaic_0001>

<llo_original>
// kernel: tpu_custom_call.1
$region0: #{tpu_custom_call.1}
  #allocation0 [shape = 'u32[]', space=smem, size = 0x4, offset = 0x4, fixed_abs, tag = 'smem constant byte address 0x4 - core index']
  #allocation1 [shape = 'u32[144,128]{1,0:T(1,128)}', space=vmem, size = 0x12000, scoped, tag = 'internal scratch']
  %s0 = inlined_call_operand.hbm [shape: f32[2,32], index: 0, kind: input, shape index: {}]
  %s1 = inlined_call_operand.hbm [shape: f32[32,128], index: 1, kind: input, shape index: {}]
  %s2 = inlined_call_operand.vmem [shape: f32[1,128], index: 2, kind: input, shape index: {}]
  %s3 = inlined_call_operand.hbm [shape: f32[2,128], index: 3, kind: output, shape index: {}]
  %s4 = sld [smem:[#allocation0]]
  $region30: #{tpu_custom_call.1} parent=0
    _
  %s6 = ssub.s32 1, %s4
  %s7 = scalar_select 0, %s6, %s4
  $region1: #{tpu_custom_call.1} parent=0
    #allocation2 [shape = 'u8[1024]{0}', space=vmem, size = 0x400, scoped, tag = 'input window, operand 0, single buffered']
    #allocation3 [shape = 's32[1]{0}', space=sflag, size = 0x4, scoped, tag = 'scoped memory for tpu_custom_call.1']
    #allocation4 [shape = 's32[1]{0}', space=sflag, size = 0x4, scoped, tag = 'scoped memory for tpu_custom_call.1']
    #allocation5 [shape = 'u8[16384]{0}', space=vmem, size = 0x4000, scoped, tag = 'input window, operand 1, single buffered']
    #allocation6 [shape = 's32[1]{0}', space=sflag, size = 0x4, scoped, tag = 'scoped memory for tpu_custom_call.1']
    #allocation7 [shape = 'u8[1024]{0}', space=vmem, size = 0x400, scoped, tag = 'output window, operand 0, single buffered']
    %8 = vsyncpa [#allocation3], 0
    %9 = vsyncpa [#allocation6], 0
    %10 = vsyncpa [#allocation4], 0
    // Predicated region
    $region2: #{tpu_custom_call.1} parent=1 // pred_check
      _
    $region3: #{tpu_custom_call.1} parent=1 // pred_check_branch
      %12 = sbr.rel (0) target = $region5
    $region4: #{tpu_custom_call.1} parent=1 // pred_region
      %s14 = ssub.s32 32, 32
      %15 = vsyncadd [#allocation3], %s14
      %s17 = sshll.u32 [#allocation2], 4
      %s18 = int_to_ptr.vmem [resolvable:$true] %s17
      %20 = dma.hbm_to_vmem [thread:$0]  %s0, 32, %s18, [#allocation3]
    $region5: #{tpu_custom_call.1} parent=1 // pred_fallthru
      _
    // Predicated region
    $region6: #{tpu_custom_call.1} parent=1 // pred_check
      _
    $region7: #{tpu_custom_call.1} parent=1 // pred_check_branch
      %22 = sbr.rel (0) target = $region9
    $region8: #{tpu_custom_call.1} parent=1 // pred_region
      %s24 = ssub.s32 512, 512
      %25 = vsyncadd [#allocation6], %s24
      %s26 = sshll.u32 [#allocation5], 4
      %s27 = int_to_ptr.vmem [resolvable:$true] %s26
      %32 = dma.hbm_to_vmem [thread:$0]  %s1, 512, %s27, [#allocation6], 128, 128, 8
    $region9: #{tpu_custom_call.1} parent=1 // pred_fallthru
      _
    // Predicated region
    $region10: #{tpu_custom_call.1} parent=1 // pred_check
      _
    $region11: #{tpu_custom_call.1} parent=1 // pred_check_branch
      %34 = sbr.rel (0) target = $region13
    $region12: #{tpu_custom_call.1} parent=1 // pred_region
      _
    $region13: #{tpu_custom_call.1} parent=1 // pred_fallthru
      _
    // Predicated region
    $region14: #{tpu_custom_call.1} parent=1 // pred_check
      _
    $region15: #{tpu_custom_call.1} parent=1 // pred_check_branch
      %36 = sbr.rel (0) target = $region17
    $region16: #{tpu_custom_call.1} parent=1 // pred_region
      %37 = dma.done [#allocation3], 32
    $region17: #{tpu_custom_call.1} parent=1 // pred_fallthru
      _
    // Predicated region
    $region18: #{tpu_custom_call.1} parent=1 // pred_check
      _
    $region19: #{tpu_custom_call.1} parent=1 // pred_check_branch
      %39 = sbr.rel (0) target = $region21
    $region20: #{tpu_custom_call.1} parent=1 // pred_region
      %40 = dma.done [#allocation6], 512
    $region21: #{tpu_custom_call.1} parent=1 // pred_fallthru
      _
    %v41 = vld [vmem:[#allocation2] sm:$0x3]
    %v42 = vld [vmem:[#allocation5] sm:$0xff]
    %v43 = vld [vmem:[#allocation5 + $0x8] sm:$0xff]
    %v44 = vld [vmem:[#allocation5 + $0x10] sm:$0xff]
    %v45 = vld [vmem:[#allocation5 + $0x18] sm:$0xff]
    %v46 = vld [vmem:[%s2] sm:$0x1]
    %v48 = vlaneseq
    %v49 = vshrl.u32 %v48, 7
    %v50 = vsub.s32 0, %v49
    %v51 = vrot.slane %v46, %v50
    %vm53 = vcmask 261120
    %v55 = vsel %vm53, %v41, 0
    %57 = vmatprep.subr.mxu0 0.0
    %58 = vmatpush1.msra.mxu0 0.0
    %59 = vmatprep.subr.mxu0 0.0
    %60 = vmatpush1.msra.mxu0 0.0
    %61 = vmatprep.subr.mxu0 0.0
    %62 = vmatpush1.msra.mxu0 0.0
    %63 = vmatprep.subr.mxu0 0.0
    %64 = vmatpush1.msra.mxu0 0.0
    %65 = vmatprep.subr.mxu0 0.0
    %66 = vmatpush1.msra.mxu0 0.0
    %67 = vmatprep.subr.mxu0 0.0
    %68 = vmatpush1.msra.mxu0 0.0
    %69 = vmatprep.subr.mxu0 0.0
    %70 = vmatpush1.msra.mxu0 0.0
    %71 = vmatprep.subr.mxu0 0.0
    %72 = vmatpush1.msra.mxu0 0.0
    %73 = vmatprep.subr.mxu0 0.0
    %74 = vmatpush1.msra.mxu0 0.0
    %75 = vmatprep.subr.mxu0 0.0
    %76 = vmatpush1.msra.mxu0 0.0
    %77 = vmatprep.subr.mxu0 0.0
    %78 = vmatpush1.msra.mxu0 0.0
    %79 = vmatprep.subr.mxu0 0.0
    %80 = vmatpush1.msra.mxu0 0.0
    %81 = vmatprep.subr.mxu0 0.0
    %82 = vmatpush1.msra.mxu0 %v45
    %83 = vmatprep.subr.mxu0 0.0
    %84 = vmatpush1.msra.mxu0 %v44
    %85 = vmatprep.subr.mxu0 0.0
    %86 = vmatpush1.msra.mxu0 %v43
    %87 = vmatprep.subr.mxu0 0.0
    %88 = vmatpush1.msra.mxu0 %v42
    %89 = vmatprep.subr.mxu0 0.0
    %90 = vmatpush2.msra.mxu0 0.0
    %91 = vmatprep.subr.mxu0 0.0
    %92 = vmatpush2.msra.mxu0 0.0
    %93 = vmatprep.subr.mxu0 0.0
    %94 = vmatpush2.msra.mxu0 0.0
    %95 = vmatprep.subr.mxu0 0.0
    %96 = vmatpush2.msra.mxu0 0.0
    %97 = vmatprep.subr.mxu0 0.0
    %98 = vmatpush2.msra.mxu0 0.0
    %99 = vmatprep.subr.mxu0 0.0
    %100 = vmatpush2.msra.mxu0 0.0
    %101 = vmatprep.subr.mxu0 0.0
    %102 = vmatpush2.msra.mxu0 0.0
    %103 = vmatprep.subr.mxu0 0.0
    %104 = vmatpush2.msra.mxu0 0.0
    %105 = vmatprep.subr.mxu0 0.0
    %106 = vmatpush2.msra.mxu0 0.0
    %107 = vmatprep.subr.mxu0 0.0
    %108 = vmatpush2.msra.mxu0 0.0
    %109 = vmatprep.subr.mxu0 0.0
    %110 = vmatpush2.msra.mxu0 0.0
    %111 = vmatprep.subr.mxu0 0.0
    %112 = vmatpush2.msra.mxu0 0.0
    %113 = vmatprep.subr.mxu0 0.0
    %114 = vmatpush2.msra.mxu0 0.0
    %115 = vmatprep.subr.mxu0 0.0
    %116 = vmatpush2.msra.mxu0 0.0
    %117 = vmatprep.subr.mxu0 0.0
    %118 = vmatpush2.msra.mxu0 0.0
    %119 = vmatprep.subr.mxu0 0.0
    %120 = vmatpush2.msra.mxu0 0.0
    %121 = vmatprep.mubr.f32.mxu0 0.0
    %122 = vmatmul.mubr.f32.gmra.mxu0 %v55
    %v123 = vpop.f32.mrf.mxu0
    %v124 = vadd.f32 %v51, %v123
    %v125 = vpop.f32.mrf.mxu0
    %126 = vdwg.mxu0
    %127 = vst [vmem:[#allocation7] sm:$0x3] %v124
    // Predicated region
    $region22: #{tpu_custom_call.1} parent=1 // pred_check
      _
    $region23: #{tpu_custom_call.1} parent=1 // pred_check_branch
      %129 = sbr.rel (0) target = $region25
    $region24: #{tpu_custom_call.1} parent=1 // pred_region
      %s131 = ssub.s32 32, 32
      %132 = vsyncadd [#allocation4], %s131
      %s134 = sshll.u32 [#allocation7], 4
      %s135 = int_to_ptr.vmem [resolvable:$true] %s134
      %137 = dma.vmem_to_hbm [thread:$0]  %s135, 32, %s3, [#allocation4]
    $region25: #{tpu_custom_call.1} parent=1 // pred_fallthru
      _
    // Predicated region
    $region26: #{tpu_custom_call.1} parent=1 // pred_check
      _
    $region27: #{tpu_custom_call.1} parent=1 // pred_check_branch
      %139 = sbr.rel (0) target = $region29
    $region28: #{tpu_custom_call.1} parent=1 // pred_region
      %140 = dma.done [#allocation4], 32
    $region29: #{tpu_custom_call.1} parent=1 // pred_fallthru
      _
    %141 = vsyncpa [#allocation3], 1
    %142 = vsyncpa [#allocation6], 1
    %143 = vsyncpa [#allocation4], 1

</llo_original>
